<compile_context>
chip_gen: v6e
topology: v6e:2x2x1
jax: 0.10.0
libtpu: 0.0.40
codegen_flags: <defaults>
</compile_context>

<pallas_src>
import functools

import jax
import jax.numpy as jnp
from jax.experimental import pallas as pl
from jax.experimental.pallas import tpu as pltpu


# Batch elements packed into one grid step.  At production shapes this can be
# lowered (e.g. to B//2) so a v7x chip gets >=2 grid steps across its two
# TensorCores; at the tiny shapes here, amortizing step overhead wins.
BATCH_BLOCK = 8


def attn_head_kernel(x_ref, wfT_ref, bf_ref, ww_ref, bw_ref,
                     attn_ref, z_ref, *, n_inst, d, bblk, total_rows):
    rows = bblk * n_inst
    x2 = x_ref[...]                                               # [rows, D] f32

    # Fused V/U projection: one MXU matmul; columns [:d] -> V path, [d:] -> U.
    h = jnp.dot(x2, wfT_ref[...],
                preferred_element_type=jnp.float32) + bf_ref[...]  # [rows, 2D]
    v = jnp.tanh(h[:, :d])
    u = jax.nn.sigmoid(h[:, d:])
    gated = v * u                                                  # [rows, D]

    # attention_weights: Linear(D, 1) == row-wise dot with ww (1, D) + bw.
    logits = jnp.sum(gated * ww_ref[...], axis=-1, keepdims=True) + bw_ref[...]
    attn = jax.nn.sigmoid(logits)                                  # [rows, 1]
    attn_ref[...] = attn.astype(attn_ref.dtype)

    # Zero any padded rows of a ragged final batch block so the reduction
    # matmul below cannot pick up garbage (0 * garbage could be NaN otherwise).
    row_in_blk = jax.lax.broadcasted_iota(jnp.int32, (rows, 1), 0)
    global_row = pl.program_id(0) * rows + row_in_blk
    w = jnp.where(global_row < total_rows, attn * x2, 0.0)         # [rows, D]

    # z = per-batch attn-weighted sum over the N instances, done on the MXU
    # via a block-diagonal one-hot matrix R[b, i] = 1 iff row i belongs to b.
    cols = jax.lax.broadcasted_iota(jnp.int32, (bblk, rows), 1)
    rws = jax.lax.broadcasted_iota(jnp.int32, (bblk, rows), 0)
    r_mat = ((cols >= rws * n_inst) & (cols < (rws + 1) * n_inst)
             ).astype(jnp.float32)                                 # [Bblk, rows]
    z = jnp.dot(r_mat, w, preferred_element_type=jnp.float32)      # [Bblk, D]
    z_ref[...] = z.astype(z_ref.dtype)


def make_kernel_params(params):
    """Build kernel-ready weight layouts ONCE (hoisted out of the forward)."""
    d = params["wv"].shape[0]
    wfT = jnp.concatenate([params["wv"], params["wu"]], axis=0).T   # [D, 2D]
    bf = jnp.concatenate([params["bv"], params["bu"]], axis=0).reshape(1, 2 * d)
    ww = params["ww"].reshape(1, d)
    bw = params["bw"].reshape(1, 1)
    return {"wfT": wfT, "bf": bf, "ww": ww, "bw": bw}


def attention_head_forward(kparams, x, mem, *, dis_mem_len):
    """Mirrors AttentionHeadPara.forward.  Returns (z, new_mem, attn_score).

    The `is_last` based mem-reset is handled by `apply_is_last` (caller level)
    so this function stays fully traceable / jittable.
    """
    B, _, D = x.shape
    cls_token = x[:, 0:1, :]                                        # [B, 1, D]
    if mem is not None:
        wsi_feat = jnp.concatenate([mem, cls_token], axis=1)        # [B, N, D]
    else:
        wsi_feat = cls_token
    N = wsi_feat.shape[1]

    bblk = min(B, BATCH_BLOCK)
    nb = pl.cdiv(B, bblk)
    wsi2d = wsi_feat.reshape(B * N, D)                              # free layout

    kernel = functools.partial(attn_head_kernel, n_inst=N, d=D,
                               bblk=bblk, total_rows=B * N)

    attn_flat, z = pl.pallas_call(
        kernel,
        out_shape=(
            jax.ShapeDtypeStruct((B * N, 1), jnp.float32),
            jax.ShapeDtypeStruct((B, D), jnp.float32),
        ),
        grid_spec=pltpu.PrefetchScalarGridSpec(
            num_scalar_prefetch=0,
            grid=(nb,),
            in_specs=[
                pl.BlockSpec((bblk * N, D), lambda b: (b, 0)),      # wsi_feat
                # Constant-index weight blocks.  At production D, single-buffer
                # them (pipeline_mode=pl.Buffered(1)) to save VMEM on v7x; at
                # D=32 the default is fine.
                pl.BlockSpec((D, 2 * D), lambda b: (0, 0)),         # [Wv;Wu]^T
                pl.BlockSpec((1, 2 * D), lambda b: (0, 0)),         # [bv;bu]
                pl.BlockSpec((1, D), lambda b: (0, 0)),             # ww
                pl.BlockSpec((1, 1), lambda b: (0, 0)),             # bw
            ],
            out_specs=(
                pl.BlockSpec((bblk * N, 1), lambda b: (b, 0)),      # attn
                pl.BlockSpec((bblk, D), lambda b: (b, 0)),          # z (D lanes)
            ),
        ),
        compiler_params=pltpu.CompilerParams(dimension_semantics=("parallel",)),
    )(wsi2d, kparams["wfT"], kparams["bf"], kparams["ww"], kparams["bw"])

    attn_score = attn_flat.reshape(B, N, 1)

    # ---- _update_mem (torch.no_grad glue, plain JAX, traced) ----
    if N > dis_mem_len:
        attn_idx = jnp.argmin(attn_score[:, :, 0], axis=1)          # [B], first min
        idx = jnp.arange(N - 1)[None, :]                            # [1, N-1]
        idx = idx + (idx >= attn_idx[:, None]).astype(idx.dtype)    # skip evicted row
        new_mem = jnp.take_along_axis(wsi_feat, idx[:, :, None], axis=1)
    else:
        new_mem = wsi_feat
    return z, new_mem, attn_score


def apply_is_last(new_mem, is_last):
    # TODO(synk): `mem = None` is Python-level control flow (matches the torch
    # module); kept OUTSIDE the jitted hot path so it never forces a host sync
    # inside the per-step forward.
    if bool(jnp.any(is_last)):
        return None
    return new_mem


def reference_forward(params, x, mem):
    """Pure-JAX reference of the hot path for a correctness check."""
    cls_token = x[:, 0:1, :]
    wsi_feat = jnp.concatenate([mem, cls_token], axis=1) if mem is not None else cls_token
    v = jnp.tanh(wsi_feat @ params["wv"].T + params["bv"])
    u = jax.nn.sigmoid(wsi_feat @ params["wu"].T + params["bu"])
    attn = jax.nn.sigmoid((v * u) @ params["ww"].T + params["bw"])
    z = jnp.sum(attn * wsi_feat, axis=1)
    return z, attn


if __name__ == "__main__":
    B, L, D = 2, 8, 32
    mem_len = 5          # N = mem_len + 1 = 6 > dis_mem_len -> eviction path
    dis_mem_len = 4

    key = jax.random.PRNGKey(0)
    ks = jax.random.split(key, 8)
    params = {
        "wv": 0.1 * jax.random.normal(ks[0], (D, D), jnp.float32),
        "bv": 0.1 * jax.random.normal(ks[1], (D,), jnp.float32),
        "wu": 0.1 * jax.random.normal(ks[2], (D, D), jnp.float32),
        "bu": 0.1 * jax.random.normal(ks[3], (D,), jnp.float32),
        "ww": 0.1 * jax.random.normal(ks[4], (1, D), jnp.float32),
        "bw": 0.1 * jax.random.normal(ks[5], (1,), jnp.float32),
    }
    x = jax.random.normal(ks[6], (B, L, D), jnp.float32)
    mem = jax.random.normal(ks[7], (B, mem_len, D), jnp.float32)
    is_last = jnp.zeros((B,), jnp.int32)     # not last sample -> keep memory

    kparams = make_kernel_params(params)     # hoisted, done once
    fwd = jax.jit(attention_head_forward, static_argnames=("dis_mem_len",))

    z, new_mem, attn_score = fwd(kparams, x, mem, dis_mem_len=dis_mem_len)
    jax.block_until_ready(z)
    jax.block_until_ready(attn_score)
    jax.block_until_ready(new_mem)
    new_mem = apply_is_last(new_mem, is_last)

    z_ref, attn_ref = reference_forward(params, x, mem)
    assert z.shape == (B, D)
    assert attn_score.shape == (B, mem_len + 1, 1)
    assert new_mem is not None and new_mem.shape == (B, mem_len, D)
    assert jnp.allclose(z, z_ref, atol=1e-5, rtol=1e-5)
    assert jnp.allclose(attn_score, attn_ref, atol=1e-5, rtol=1e-5)

    print("KERNEL_OK")
</pallas_src>

<mosaic_0001>
module attributes {stable_mosaic.version = 11 : i64} {
  func.func @attn_head_kernel(%arg0: i32, %arg1: memref<12x32xf32, #tpu.memory_space<vmem>>, %arg2: memref<32x64xf32, #tpu.memory_space<vmem>>, %arg3: memref<1x64xf32, #tpu.memory_space<vmem>>, %arg4: memref<1x32xf32, #tpu.memory_space<vmem>>, %arg5: memref<1x1xf32, #tpu.memory_space<vmem>>, %arg6: memref<12x1xf32, #tpu.memory_space<vmem>>, %arg7: memref<2x32xf32, #tpu.memory_space<vmem>>) attributes {dimension_semantics = [#tpu.dimension_semantics<parallel>], iteration_bounds = array<i64: 1>, scalar_prefetch = 0 : i64, scratch_operands = 0 : i64, tpu.core_type = #tpu.core_type<tc>, window_params = [{transform_indices = @transform_0, window_bounds = array<i64: 12, 32>}, {pipeline_mode = #tpu.pipeline_mode<synchronous>, transform_indices = @transform_1, window_bounds = array<i64: 32, 64>}, {pipeline_mode = #tpu.pipeline_mode<synchronous>, transform_indices = @transform_2, window_bounds = array<i64: 1, 64>}, {pipeline_mode = #tpu.pipeline_mode<synchronous>, transform_indices = @transform_3, window_bounds = array<i64: 1, 32>}, {pipeline_mode = #tpu.pipeline_mode<synchronous>, transform_indices = @transform_4, window_bounds = array<i64: 1, 1>}, {transform_indices = @transform_5, window_bounds = array<i64: 12, 1>}, {transform_indices = @transform_6, window_bounds = array<i64: 2, 32>}]} {
    %c0 = arith.constant 0 : index
    %c0_0 = arith.constant 0 : index
    %0 = vector.load %arg1[%c0, %c0_0] : memref<12x32xf32, #tpu.memory_space<vmem>>, vector<12x32xf32>
    %c0_1 = arith.constant 0 : index
    %c0_2 = arith.constant 0 : index
    %1 = vector.load %arg2[%c0_1, %c0_2] : memref<32x64xf32, #tpu.memory_space<vmem>>, vector<32x64xf32>
    %cst = arith.constant dense<0.000000e+00> : vector<12x64xf32>
    %2 = tpu.matmul %0, %1, %cst {dimension_numbers = #tpu.dot_dimension_numbers<[1], [0], [0], [1], [0, 0, 1, 1], [], []>} : vector<12x32xf32>, vector<32x64xf32>, vector<12x64xf32> -> vector<12x64xf32>
    %c0_3 = arith.constant 0 : index
    %c0_4 = arith.constant 0 : index
    %3 = vector.load %arg3[%c0_3, %c0_4] : memref<1x64xf32, #tpu.memory_space<vmem>>, vector<1x64xf32>
    %4 = vector.broadcast %3 : vector<1x64xf32> to vector<12x64xf32>
    %5 = arith.addf %2, %4 : vector<12x64xf32>
    %6 = vector.extract_strided_slice %5 {offsets = [0, 0], sizes = [12, 32], strides = [1, 1]} : vector<12x64xf32> to vector<12x32xf32>
    %7 = math.tanh %6 : vector<12x32xf32>
    %8 = vector.extract_strided_slice %5 {offsets = [0, 32], sizes = [12, 32], strides = [1, 1]} : vector<12x64xf32> to vector<12x32xf32>
    %9 = arith.negf %8 : vector<12x32xf32>
    %10 = math.exp %9 : vector<12x32xf32>
    %cst_5 = arith.constant 1.000000e+00 : f32
    %11 = vector.broadcast %cst_5 : f32 to vector<12x32xf32>
    %12 = arith.addf %11, %10 : vector<12x32xf32>
    %13 = arith.divf %11, %12 : vector<12x32xf32>
    %14 = arith.mulf %7, %13 : vector<12x32xf32>
    %c0_6 = arith.constant 0 : index
    %c0_7 = arith.constant 0 : index
    %15 = vector.load %arg4[%c0_6, %c0_7] : memref<1x32xf32, #tpu.memory_space<vmem>>, vector<1x32xf32>
    %16 = vector.broadcast %15 : vector<1x32xf32> to vector<12x32xf32>
    %17 = arith.mulf %14, %16 : vector<12x32xf32>
    %cst_8 = arith.constant dense<0.000000e+00> : vector<12xf32>
    %18 = vector.multi_reduction <add>, %17, %cst_8 [1] : vector<12x32xf32> to vector<12xf32>
    %19 = vector.shape_cast %18 : vector<12xf32> to vector<12x1xf32>
    %c0_9 = arith.constant 0 : index
    %c0_10 = arith.constant 0 : index
    %20 = vector.load %arg5[%c0_9, %c0_10] : memref<1x1xf32, #tpu.memory_space<vmem>>, vector<1x1xf32>
    %21 = vector.broadcast %20 : vector<1x1xf32> to vector<12x1xf32>
    %22 = arith.addf %19, %21 : vector<12x1xf32>
    %23 = arith.negf %22 : vector<12x1xf32>
    %24 = math.exp %23 : vector<12x1xf32>
    %cst_11 = arith.constant 1.000000e+00 : f32
    %25 = vector.broadcast %cst_11 : f32 to vector<12x1xf32>
    %26 = arith.addf %25, %24 : vector<12x1xf32>
    %27 = arith.divf %25, %26 : vector<12x1xf32>
    %c0_12 = arith.constant 0 : index
    %c0_13 = arith.constant 0 : index
    %28 = vector.load %arg6[%c0_12, %c0_13] : memref<12x1xf32, #tpu.memory_space<vmem>>, vector<12x1xf32>
    tpu.vector_store %arg6[%c0_12, %c0_13], %27 {strides = array<i32>} : memref<12x1xf32, #tpu.memory_space<vmem>>, vector<12x1xf32>,
    %29 = tpu.iota {dimensions = array<i32: 0>} : vector<12x1xi32>
    %c12_i32 = arith.constant 12 : i32
    %30 = arith.muli %arg0, %c12_i32 : i32
    %31 = vector.broadcast %30 : i32 to vector<12x1xi32>
    %32 = arith.addi %31, %29 : vector<12x1xi32>
    %c12_i32_14 = arith.constant 12 : i32
    %33 = vector.broadcast %c12_i32_14 : i32 to vector<12x1xi32>
    %34 = arith.cmpi slt, %32, %33 : vector<12x1xi32>
    %35 = vector.broadcast %27 : vector<12x1xf32> to vector<12x32xf32>
    %36 = arith.mulf %35, %0 : vector<12x32xf32>
    %cst_15 = arith.constant 0.000000e+00 : f32
    %37 = vector.shape_cast %34 : vector<12x1xi1> to vector<12x1xi1>
    %38 = vector.broadcast %37 : vector<12x1xi1> to vector<12x32xi1>
    %39 = vector.broadcast %cst_15 : f32 to vector<12x32xf32>
    %40 = arith.select %38, %36, %39 : vector<12x32xi1>, vector<12x32xf32>
    %41 = tpu.iota {dimensions = array<i32: 1>} : vector<2x12xi32>
    %42 = tpu.iota {dimensions = array<i32: 0>} : vector<2x12xi32>
    %c6_i32 = arith.constant 6 : i32
    %43 = vector.broadcast %c6_i32 : i32 to vector<2x12xi32>
    %44 = arith.muli %42, %43 : vector<2x12xi32>
    %45 = arith.cmpi sge, %41, %44 : vector<2x12xi32>
    %c1_i32 = arith.constant 1 : i32
    %46 = vector.broadcast %c1_i32 : i32 to vector<2x12xi32>
    %47 = arith.addi %42, %46 : vector<2x12xi32>
    %c6_i32_16 = arith.constant 6 : i32
    %48 = vector.broadcast %c6_i32_16 : i32 to vector<2x12xi32>
    %49 = arith.muli %47, %48 : vector<2x12xi32>
    %50 = arith.cmpi slt, %41, %49 : vector<2x12xi32>
    %51 = arith.andi %45, %50 : vector<2x12xi1>
    %52 = arith.extui %51 : vector<2x12xi1> to vector<2x12xi32>
    %53 = arith.sitofp %52 : vector<2x12xi32> to vector<2x12xf32>
    %cst_17 = arith.constant dense<0.000000e+00> : vector<2x32xf32>
    %54 = tpu.matmul %53, %40, %cst_17 {dimension_numbers = #tpu.dot_dimension_numbers<[1], [0], [0], [1], [0, 0, 1, 1], [], []>} : vector<2x12xf32>, vector<12x32xf32>, vector<2x32xf32> -> vector<2x32xf32>
    %c0_18 = arith.constant 0 : index
    %c0_19 = arith.constant 0 : index
    %55 = vector.load %arg7[%c0_18, %c0_19] : memref<2x32xf32, #tpu.memory_space<vmem>>, vector<2x32xf32>
    tpu.vector_store %arg7[%c0_18, %c0_19], %54 {strides = array<i32>} : memref<2x32xf32, #tpu.memory_space<vmem>>, vector<2x32xf32>,
    return
  }
  func.func @transform_0(%arg0: i32) -> (i32, i32) {
    %c0_i32 = arith.constant 0 : i32
    %c0_i32_0 = arith.constant 0 : i32
    return %arg0, %c0_i32 : i32, i32
  }
  func.func @transform_1(%arg0: i32) -> (i32, i32) {
    %c0_i32 = arith.constant 0 : i32
    %c0_i32_0 = arith.constant 0 : i32
    %c0_i32_1 = arith.constant 0 : i32
    return %c0_i32, %c0_i32_0 : i32, i32
  }
  func.func @transform_2(%arg0: i32) -> (i32, i32) {
    %c0_i32 = arith.constant 0 : i32
    %c0_i32_0 = arith.constant 0 : i32
    %c0_i32_1 = arith.constant 0 : i32
    return %c0_i32, %c0_i32_0 : i32, i32
  }
  func.func @transform_3(%arg0: i32) -> (i32, i32) {
    %c0_i32 = arith.constant 0 : i32
    %c0_i32_0 = arith.constant 0 : i32
    %c0_i32_1 = arith.constant 0 : i32
    return %c0_i32, %c0_i32_0 : i32, i32
  }
  func.func @transform_4(%arg0: i32) -> (i32, i32) {
    %c0_i32 = arith.constant 0 : i32
    %c0_i32_0 = arith.constant 0 : i32
    %c0_i32_1 = arith.constant 0 : i32
    return %c0_i32, %c0_i32_0 : i32, i32
  }
  func.func @transform_5(%arg0: i32) -> (i32, i32) {
    %c0_i32 = arith.constant 0 : i32
    %c0_i32_0 = arith.constant 0 : i32
    return %arg0, %c0_i32 : i32, i32
  }
  func.func @transform_6(%arg0: i32) -> (i32, i32) {
    %c0_i32 = arith.constant 0 : i32
    %c0_i32_0 = arith.constant 0 : i32
    return %arg0, %c0_i32 : i32, i32
  }
}

</mosaic_0001>

<llo_original>
// kernel: attention_head_forward.1
$region0: #{attention_head_forward.1}
  #allocation0 [shape = 'u32[]', space=smem, size = 0x4, offset = 0x4, fixed_abs, tag = 'smem constant byte address 0x4 - core index']
  #allocation1 [shape = 'u32[144,128]{1,0:T(1,128)}', space=vmem, size = 0x12000, scoped, tag = 'internal scratch']
  #allocation2 [shape = 'f32[1,1]{1,0:T(1,128)S(1)}', space=vmem, size = 0x200, scoped, tag = 'scoped memory for attention_head_forward.1']
  %s0 = inlined_call_operand.vmem [shape: f32[12,32], index: 0, kind: input, shape index: {}]
  %s1 = inlined_call_operand.vmem [shape: f32[32,64], index: 1, kind: input, shape index: {}]
  %s2 = inlined_call_operand.vmem [shape: f32[1,64], index: 2, kind: input, shape index: {}]
  %s3 = inlined_call_operand.vmem [shape: f32[1,32], index: 3, kind: input, shape index: {}]
  %s4 = inlined_call_operand.<no memory space> [shape: f32[1,1], index: 4, kind: input, shape index: {}]
  %s5 = inlined_call_operand.vmem [shape: f32[12,1], index: 5, kind: output, shape index: {0}]
  %s6 = inlined_call_operand.hbm [shape: f32[2,32], index: 6, kind: output, shape index: {1}]
  %7 = xla_tuple %s5, %s6
  %s8 = sld [smem:[#allocation0]]
  $region38: #{attention_head_forward.1} parent=0
    _
  %s10 = ssub.s32 1, %s8
  %s11 = scalar_select 0, %s10, %s8
  %v12 = vstv %s4
  %13 = vst [vmem:[#allocation2] sm:$0x1] %v12
  $region1: #{attention_head_forward.1} parent=0
    #allocation3 [shape = 'u8[1024]{0}', space=vmem, size = 0x400, scoped, tag = 'output window, operand 1, single buffered']
    #allocation4 [shape = 's32[1]{0}', space=sflag, size = 0x4, scoped, tag = 'scoped memory for attention_head_forward.1']
    %14 = vsyncpa [#allocation4], 0
    // Predicated region
    $region2: #{attention_head_forward.1} parent=1 // pred_check
      _
    $region3: #{attention_head_forward.1} parent=1 // pred_check_branch
      %16 = sbr.rel (0) target = $region5
    $region4: #{attention_head_forward.1} parent=1 // pred_region
      _
    $region5: #{attention_head_forward.1} parent=1 // pred_fallthru
      _
    // Predicated region
    $region6: #{attention_head_forward.1} parent=1 // pred_check
      _
    $region7: #{attention_head_forward.1} parent=1 // pred_check_branch
      %18 = sbr.rel (0) target = $region9
    $region8: #{attention_head_forward.1} parent=1 // pred_region
      _
    $region9: #{attention_head_forward.1} parent=1 // pred_fallthru
      _
    // Predicated region
    $region10: #{attention_head_forward.1} parent=1 // pred_check
      _
    $region11: #{attention_head_forward.1} parent=1 // pred_check_branch
      %20 = sbr.rel (0) target = $region13
    $region12: #{attention_head_forward.1} parent=1 // pred_region
      _
    $region13: #{attention_head_forward.1} parent=1 // pred_fallthru
      _
    // Predicated region
    $region14: #{attention_head_forward.1} parent=1 // pred_check
      _
    $region15: #{attention_head_forward.1} parent=1 // pred_check_branch
      %22 = sbr.rel (0) target = $region17
    $region16: #{attention_head_forward.1} parent=1 // pred_region
      _
    $region17: #{attention_head_forward.1} parent=1 // pred_fallthru
      _
    // Predicated region
    $region18: #{attention_head_forward.1} parent=1 // pred_check
      _
    $region19: #{attention_head_forward.1} parent=1 // pred_check_branch
      %24 = sbr.rel (0) target = $region21
    $region20: #{attention_head_forward.1} parent=1 // pred_region
      _
    $region21: #{attention_head_forward.1} parent=1 // pred_fallthru
      _
    %v25 = vld [vmem:[%s0] sm:$0xff]
    %v26 = vld [vmem:[%s0 + $0x8] sm:$0xf]
    %v27 = vld [vmem:[%s1] sm:$0xff]
    %v28 = vld [vmem:[%s1 + $0x8] sm:$0xff]
    %v29 = vld [vmem:[%s1 + $0x10] sm:$0xff]
    %v30 = vld [vmem:[%s1 + $0x18] sm:$0xff]
    %v31 = vld [vmem:[%s2] sm:$0x1]
    %v33 = vlaneseq
    %v34 = vshrl.u32 %v33, 7
    %v35 = vsub.s32 0, %v34
    %v36 = vrot.slane %v31, %v35
    %vm38 = vcmask 261120
    %v40 = vsel %vm38, %v25, 0
    %v43 = vsel %vm38, %v26, 0
    %45 = vmatprep.subr.mxu0 0.0
    %46 = vmatpush1.msra.mxu0 0.0
    %47 = vmatprep.subr.mxu0 0.0
    %48 = vmatpush1.msra.mxu0 0.0
    %49 = vmatprep.subr.mxu0 0.0
    %50 = vmatpush1.msra.mxu0 0.0
    %51 = vmatprep.subr.mxu0 0.0
    %52 = vmatpush1.msra.mxu0 0.0
    %53 = vmatprep.subr.mxu0 0.0
    %54 = vmatpush1.msra.mxu0 0.0
    %55 = vmatprep.subr.mxu0 0.0
    %56 = vmatpush1.msra.mxu0 0.0
    %57 = vmatprep.subr.mxu0 0.0
    %58 = vmatpush1.msra.mxu0 0.0
    %59 = vmatprep.subr.mxu0 0.0
    %60 = vmatpush1.msra.mxu0 0.0
    %61 = vmatprep.subr.mxu0 0.0
    %62 = vmatpush1.msra.mxu0 0.0
    %63 = vmatprep.subr.mxu0 0.0
    %64 = vmatpush1.msra.mxu0 0.0
    %65 = vmatprep.subr.mxu0 0.0
    %66 = vmatpush1.msra.mxu0 0.0
    %67 = vmatprep.subr.mxu0 0.0
    %68 = vmatpush1.msra.mxu0 0.0
    %69 = vmatprep.subr.mxu0 0.0
    %70 = vmatpush1.msra.mxu0 %v30
    %71 = vmatprep.subr.mxu0 0.0
    %72 = vmatpush1.msra.mxu0 %v29
    %73 = vmatprep.subr.mxu0 0.0
    %74 = vmatpush1.msra.mxu0 %v28
    %75 = vmatprep.subr.mxu0 0.0
    %76 = vmatpush1.msra.mxu0 %v27
    %77 = vmatprep.subr.mxu0 0.0
    %78 = vmatpush2.msra.mxu0 0.0
    %79 = vmatprep.subr.mxu0 0.0
    %80 = vmatpush2.msra.mxu0 0.0
    %81 = vmatprep.subr.mxu0 0.0
    %82 = vmatpush2.msra.mxu0 0.0
    %83 = vmatprep.subr.mxu0 0.0
    %84 = vmatpush2.msra.mxu0 0.0
    %85 = vmatprep.subr.mxu0 0.0
    %86 = vmatpush2.msra.mxu0 0.0
    %87 = vmatprep.subr.mxu0 0.0
    %88 = vmatpush2.msra.mxu0 0.0
    %89 = vmatprep.subr.mxu0 0.0
    %90 = vmatpush2.msra.mxu0 0.0
    %91 = vmatprep.subr.mxu0 0.0
    %92 = vmatpush2.msra.mxu0 0.0
    %93 = vmatprep.subr.mxu0 0.0
    %94 = vmatpush2.msra.mxu0 0.0
    %95 = vmatprep.subr.mxu0 0.0
    %96 = vmatpush2.msra.mxu0 0.0
    %97 = vmatprep.subr.mxu0 0.0
    %98 = vmatpush2.msra.mxu0 0.0
    %99 = vmatprep.subr.mxu0 0.0
    %100 = vmatpush2.msra.mxu0 0.0
    %101 = vmatprep.subr.mxu0 0.0
    %102 = vmatpush2.msra.mxu0 0.0
    %103 = vmatprep.subr.mxu0 0.0
    %104 = vmatpush2.msra.mxu0 0.0
    %105 = vmatprep.subr.mxu0 0.0
    %106 = vmatpush2.msra.mxu0 0.0
    %107 = vmatprep.subr.mxu0 0.0
    %108 = vmatpush2.msra.mxu0 0.0
    %109 = vmatprep.mubr.f32.mxu0 0.0
    %110 = vmatmul.mubr.f32.gmra.mxu0 %v40
    %v111 = vpop.f32.mrf.mxu0
    %v112 = vadd.f32 %v36, %v111
    %v113 = vpop.f32.mrf.mxu0
    %114 = vmatprep.mubr.f32.mxu0 0.0
    %115 = vmatmul.mubr.f32.gmra.mxu0 %v43
    %v116 = vpop.f32.mrf.mxu0
    %v117 = vadd.f32 %v36, %v116
    %v118 = vpop.f32.mrf.mxu0
    %119 = vdwg.mxu0
    %v120 = vtanh.pop %v112
    %v121 = vtanh.pop %v117
    %v122 = vxor.u32 %v112, 2147483648
    %v123 = vxor.u32 %v117, 2147483648
    %v124 = vmul.f32 %v122, 1.442695
    %v125 = vpow.pop %v124
    %v126 = vmul.f32 %v123, 1.442695
    %v127 = vpow.pop %v126
    %v128 = vadd.f32 %v125, 1.0
    %v129 = vadd.f32 %v127, 1.0
    %v130 = vrcp.pop %v128
    %v131 = vmul.f32 1.0, %v130
    %v132 = vrcp.pop %v129
    %v133 = vmul.f32 1.0, %v132
    %136 = vrot.lane.b32.xlu0 %v131, 96
    %v137 = vpop.permute.xlu0 %136
    %138 = vrot.lane.b32.xlu0 %v133, 96
    %v139 = vpop.permute.xlu0 %138
    %v142 = vmul.f32 %v120, %v137
    %v143 = vmul.f32 %v121, %v139
    %v144 = vld [vmem:[%s3] sm:$0x1]
    %v146 = vlaneseq
    %v147 = vshrl.u32 %v146, 7
    %v148 = vsub.s32 0, %v147
    %v149 = vrot.slane %v144, %v148
    %v151 = vmul.f32 %v142, %v149
    %v152 = vmul.f32 %v143, %v149
    %v153 = vsel %vm38, %v151, 0.0
    %154 = vadd.xlane.f32.xlu0 %v153
    %v155 = vpop.xlane.xlu0 %154
    %vm156 = vcmask 257024
    %v157 = vsel %vm156, %v152, 0.0
    %158 = vadd.xlane.f32.xlu0 %v157
    %v159 = vpop.xlane.xlu0 %158
    %v160 = vld [vmem:[#allocation2] sm:$0x1]
    %v162 = vlaneseq
    %v163 = vshrl.u32 %v162, 7
    %v164 = vsub.s32 0, %v163
    %v165 = vrot.slane %v160, %v164
    %v167 = vadd.f32 %v155, %v165
    %v168 = vadd.f32 %v159, %v165
    %v169 = vxor.u32 %v167, 2147483648
    %v170 = vxor.u32 %v168, 2147483648
    %v171 = vmul.f32 %v169, 1.442695
    %v172 = vpow.pop %v171
    %v173 = vmul.f32 %v170, 1.442695
    %v174 = vpow.pop %v173
    %v175 = vadd.f32 %v172, 1.0
    %v176 = vadd.f32 %v174, 1.0
    %v177 = vrcp.pop %v175
    %v178 = vmul.f32 1.0, %v177
    %v179 = vrcp.pop %v176
    %v180 = vmul.f32 1.0, %v179
    %vm181 = vcmask 7168
    %182 = vst.msk [vmem:[%s5] sm:$0xff] %vm181, %v178
    %vm183 = vcmask 3072
    %184 = vst.msk [vmem:[%s5 + $0x8] sm:$0xf] %vm183, %v180
    %v185 = vlaneseq
    %v186 = vshrl.u32 %v185, 7
    %v187 = vadd.s32 %v186, 8
    %s188 = smul.u32 0, 12
    %v189 = vstv %s188
    %v190 = vadd.s32 %v189, %v186
    %v191 = vadd.s32 %v189, %v187
    %vm192 = vcmp.lt.s32.totalorder %v190, 12
    %vm193 = vcmp.lt.s32.totalorder %v191, 12
    %195 = vset.pattern.permute.xlu0 0
    %196 = vperm.xlu0 %195, %v178
    %v197 = vpop.permute.xlu0 %196
    %200 = vset.pattern.permute.xlu0 0
    %201 = vperm.xlu0 %200, %v180
    %v202 = vpop.permute.xlu0 %201
    %v204 = vmul.f32 %v197, %v25
    %v205 = vmul.f32 %v202, %v26
    %v206 = vsel %vm192, 1, 0
    %v207 = vsel %vm193, 1, 0
    %vm208 = vcmp.eq.s32.totalorder %v206, 1
    %vm209 = vcmp.eq.s32.totalorder %v207, 1
    %v210 = vsel %vm208, %v204, 0.0
    %v211 = vsel %vm209, %v205, 0.0
    %v212 = vlaneseq
    %v213 = vand.u32 %v212, 127
    %v214 = vmul.u32 %v186, 6
    %vm215 = vcmp.ge.s32.totalorder %v213, %v214
    %v216 = vadd.s32 %v186, 1
    %v217 = vmul.u32 %v216, 6
    %vm218 = vcmp.lt.s32.totalorder %v213, %v217
    %vm219 = vmand %vm215, %vm218
    %v220 = vsel %vm219, 1, 0
    %v221 = vcvt.s32.f32 %v220
    %vm222 = vcmask 97280
    %v224 = vsel %vm222, %v221, 0
    %vm226 = vcmask 1043456
    %v228 = vsel %vm226, %v211, 0
    %230 = vmatprep.subr.mxu0 0.0
    %231 = vmatpush1.msra.mxu0 0.0
    %232 = vmatprep.subr.mxu0 0.0
    %233 = vmatpush1.msra.mxu0 0.0
    %234 = vmatprep.subr.mxu0 0.0
    %235 = vmatpush1.msra.mxu0 0.0
    %236 = vmatprep.subr.mxu0 0.0
    %237 = vmatpush1.msra.mxu0 0.0
    %238 = vmatprep.subr.mxu0 0.0
    %239 = vmatpush1.msra.mxu0 0.0
    %240 = vmatprep.subr.mxu0 0.0
    %241 = vmatpush1.msra.mxu0 0.0
    %242 = vmatprep.subr.mxu0 0.0
    %243 = vmatpush1.msra.mxu0 0.0
    %244 = vmatprep.subr.mxu0 0.0
    %245 = vmatpush1.msra.mxu0 0.0
    %246 = vmatprep.subr.mxu0 0.0
    %247 = vmatpush1.msra.mxu0 0.0
    %248 = vmatprep.subr.mxu0 0.0
    %249 = vmatpush1.msra.mxu0 0.0
    %250 = vmatprep.subr.mxu0 0.0
    %251 = vmatpush1.msra.mxu0 0.0
    %252 = vmatprep.subr.mxu0 0.0
    %253 = vmatpush1.msra.mxu0 0.0
    %254 = vmatprep.subr.mxu0 0.0
    %255 = vmatpush1.msra.mxu0 0.0
    %256 = vmatprep.subr.mxu0 0.0
    %257 = vmatpush1.msra.mxu0 0.0
    %258 = vmatprep.subr.mxu0 0.0
    %259 = vmatpush1.msra.mxu0 %v228
    %260 = vmatprep.subr.mxu0 0.0
    %261 = vmatpush1.msra.mxu0 %v210
    %262 = vmatprep.subr.mxu0 0.0
    %263 = vmatpush2.msra.mxu0 0.0
    %264 = vmatprep.subr.mxu0 0.0
    %265 = vmatpush2.msra.mxu0 0.0
    %266 = vmatprep.subr.mxu0 0.0
    %267 = vmatpush2.msra.mxu0 0.0
    %268 = vmatprep.subr.mxu0 0.0
    %269 = vmatpush2.msra.mxu0 0.0
    %270 = vmatprep.subr.mxu0 0.0
    %271 = vmatpush2.msra.mxu0 0.0
    %272 = vmatprep.subr.mxu0 0.0
    %273 = vmatpush2.msra.mxu0 0.0
    %274 = vmatprep.subr.mxu0 0.0
    %275 = vmatpush2.msra.mxu0 0.0
    %276 = vmatprep.subr.mxu0 0.0
    %277 = vmatpush2.msra.mxu0 0.0
    %278 = vmatprep.subr.mxu0 0.0
    %279 = vmatpush2.msra.mxu0 0.0
    %280 = vmatprep.subr.mxu0 0.0
    %281 = vmatpush2.msra.mxu0 0.0
    %282 = vmatprep.subr.mxu0 0.0
    %283 = vmatpush2.msra.mxu0 0.0
    %284 = vmatprep.subr.mxu0 0.0
    %285 = vmatpush2.msra.mxu0 0.0
    %286 = vmatprep.subr.mxu0 0.0
    %287 = vmatpush2.msra.mxu0 0.0
    %288 = vmatprep.subr.mxu0 0.0
    %289 = vmatpush2.msra.mxu0 0.0
    %290 = vmatprep.subr.mxu0 0.0
    %291 = vmatpush2.msra.mxu0 0.0
    %292 = vmatprep.subr.mxu0 0.0
    %293 = vmatpush2.msra.mxu0 0.0
    %294 = vmatprep.mubr.f32.mxu0 0.0
    %295 = vmatmul.mubr.f32.gmra.mxu0 %v224
    %v296 = vpop.f32.mrf.mxu0
    %v297 = vadd.f32 0.0, %v296
    %v298 = vpop.f32.mrf.mxu0
    %299 = vdwg.mxu0
    %vm300 = vcmask 254976
    %301 = vst.msk [vmem:[#allocation3] sm:$0x3] %vm300, %v297
    // Predicated region
    $region22: #{attention_head_forward.1} parent=1 // pred_check
      _
    $region23: #{attention_head_forward.1} parent=1 // pred_check_branch
      %303 = sbr.rel (0) target = $region25
    $region24: #{attention_head_forward.1} parent=1 // pred_region
      _
    $region25: #{attention_head_forward.1} parent=1 // pred_fallthru
      _
    // Predicated region
    $region26: #{attention_head_forward.1} parent=1 // pred_check
      _
    $region27: #{attention_head_forward.1} parent=1 // pred_check_branch
      %305 = sbr.rel (0) target = $region29
    $region28: #{attention_head_forward.1} parent=1 // pred_region
      %s307 = ssub.s32 32, 32
      %308 = vsyncadd [#allocation4], %s307
      %s310 = sshll.u32 [#allocation3], 4
      %s311 = int_to_ptr.vmem [resolvable:$true] %s310
      %313 = dma.vmem_to_hbm [thread:$0]  %s311, 32, %s6, [#allocation4]
    $region29: #{attention_head_forward.1} parent=1 // pred_fallthru
      _
    // Predicated region
    $region30: #{attention_head_forward.1} parent=1 // pred_check
      _
    $region31: #{attention_head_forward.1} parent=1 // pred_check_branch
      %315 = sbr.rel (0) target = $region33
    $region32: #{attention_head_forward.1} parent=1 // pred_region
      _
    $region33: #{attention_head_forward.1} parent=1 // pred_fallthru
      _
    // Predicated region
    $region34: #{attention_head_forward.1} parent=1 // pred_check
      _
    $region35: #{attention_head_forward.1} parent=1 // pred_check_branch
      %317 = sbr.rel (0) target = $region37
    $region36: #{attention_head_forward.1} parent=1 // pred_region
      %318 = dma.done [#allocation4], 32
    $region37: #{attention_head_forward.1} parent=1 // pred_fallthru
      _
    %319 = vsyncpa [#allocation4], 1

</llo_original>
